<compile_context>
chip_gen: v5e
topology: v5e:2x2
jax: 0.10.0
libtpu: 0.0.40
codegen_flags: <defaults>
</compile_context>

<pallas_src>
import functools

import jax
import jax.numpy as jnp
from jax.experimental import pallas as pl
from jax.experimental.pallas import tpu as pltpu


def sig_t_kernel(w_ref, out_ref, *, tm, c):
    """One (tm, c) row block: T = row_l1_normalize(I + sigmoid(w) * (1 - I))."""
    i = pl.program_id(0)
    # Global row index so the diagonal lands correctly when the row axis is tiled.
    row = jax.lax.broadcasted_iota(jnp.int32, (tm, c), 0) + i * tm
    col = jax.lax.broadcasted_iota(jnp.int32, (tm, c), 1)
    diag = row == col
    # sigmoid(w) == 0.5*tanh(0.5*w) + 0.5 : one EUP tanh + VPU fma (cheaper than
    # exp + divide).  Fused with the diagonal select: 1.0 on-diag, sigmoid off-diag.
    sig = 0.5 * jnp.tanh(0.5 * w_ref[...]) + 0.5
    # Stage the un-normalized T directly in out_ref (no tile-sized temporary).
    out_ref[...] = jnp.where(diag, jnp.float32(1.0), sig)
    # F.normalize(p=1, dim=1): all entries are strictly positive (sigmoid > 0,
    # diagonal == 1), so sum == L1 norm and denom >= 1 -> no eps clamp needed.
    denom = jnp.sum(out_ref[...], axis=1, keepdims=True)   # XLU cross-lane reduce
    # Exact reciprocal (divide path) + broadcast multiply; denom is only (tm,1).
    out_ref[...] = out_ref[...] * pl.reciprocal(denom, approx=False)


def _choose_row_tile(c):
    """Pick TM so that (a) every tile is full (TM divides C, multiple of 8),
    (b) per-buffer size stays ~<=3 MiB (in 2 bufs + out 2 bufs fits every
    generation's scoped VMEM with headroom), and (c) for C >= 256 the tile
    count is >= 2 and preferably even so the parallel grid axis balances
    across v7x's two TensorCores."""
    if c < 256:
        return c  # single full-array block (satisfies the (8,128) rule)
    budget_rows = max(8, ((3 * 1024 * 1024) // (c * 4)) // 8 * 8)  # ~3 MiB/buffer
    max_tm = min(budget_rows, c // 2)  # force >= 2 tiles
    best_even = None   # largest TM with an even number of tiles
    best_any = None    # largest TM that divides C at all
    for tm in range(8, max_tm + 1, 8):
        if c % tm == 0:
            best_any = tm
            if (c // tm) % 2 == 0:
                best_even = tm
    if best_even is not None:
        return best_even
    if best_any is not None:
        return best_any
    # Fallback (C not divisible by any multiple of 8): masked last block,
    # still >= 2 tiles. Padded-row garbage never leaves the kernel.
    return max(8, min(budget_rows, ((c + 15) // 16) * 8))


def _sig_t_reference(w):
    """Fused plain-JAX forward (used for tiny C and for correctness checks)."""
    c = w.shape[0]
    eye = jnp.eye(c, dtype=jnp.float32)
    t = eye + jax.nn.sigmoid(w) * (1.0 - eye)
    return t / jnp.maximum(jnp.sum(jnp.abs(t), axis=1, keepdims=True), 1e-12)


def sig_t_forward(w, *, force_pallas=False):
    c = w.shape[0]
    if c < 128 and not force_pallas:
        # ~KB-scale problem: pallas_call launch overhead dominates; let XLA fuse it.
        return _sig_t_reference(w)
    tm = _choose_row_tile(c)
    kernel = functools.partial(sig_t_kernel, tm=tm, c=c)
    return pl.pallas_call(
        kernel,
        out_shape=jax.ShapeDtypeStruct((c, c), jnp.float32),
        grid=(pl.cdiv(c, tm),),
        in_specs=[pl.BlockSpec((tm, c), lambda i: (i, 0))],
        out_specs=pl.BlockSpec((tm, c), lambda i: (i, 0)),
        compiler_params=pltpu.CompilerParams(
            # Row blocks are independent -> shard across TensorCores (v7x megacore).
            dimension_semantics=("parallel",),
            # Explicit scoped-VMEM budget: 4 tile buffers (~3 MiB each) + Mosaic
            # scratch fit easily; 48 MiB is safe on v5e/v6e (128 MiB physical)
            # and within v7x's 64 MiB physical VMEM.
            vmem_limit_bytes=48 * 1024 * 1024,
        ),
    )(w)


if __name__ == "__main__":
    _ = jax.random.PRNGKey(0)  # reproducibility hook; init is deterministic below
    volmin_init = 2.0

    # Case 1: module-sized test (num_class=16), Pallas path forced so the
    # kernel itself is exercised.  w = -VolMin_init * ones(C, C), as in PyTorch.
    # Case 2: C=384 exercises the row-tiled multi-block path (2 full tiles).
    for num_class, force in ((16, True), (384, False)):
        w = -volmin_init * jnp.ones((num_class, num_class), dtype=jnp.float32)
        T = jax.block_until_ready(sig_t_forward(w, force_pallas=force))
        T_ref = _sig_t_reference(w)
        assert jnp.allclose(T, T_ref, atol=1e-6, rtol=1e-6), (
            f"mismatch vs reference at C={num_class}")
        assert jnp.allclose(jnp.sum(T, axis=1), 1.0, atol=1e-6), (
            f"rows not L1-normalized at C={num_class}")

    print("KERNEL_OK")
</pallas_src>

<mosaic_0001>
module attributes {stable_mosaic.version = 11 : i64} {
  func.func @sig_t_kernel(%arg0: i32, %arg1: memref<16x16xf32, #tpu.memory_space<vmem>>, %arg2: memref<16x16xf32, #tpu.memory_space<vmem>>) attributes {dimension_semantics = [#tpu.dimension_semantics<parallel>], iteration_bounds = array<i64: 1>, scalar_prefetch = 0 : i64, scratch_operands = 0 : i64, tpu.core_type = #tpu.core_type<tc>, window_params = [{transform_indices = @transform_0, window_bounds = array<i64: 16, 16>}, {transform_indices = @transform_1, window_bounds = array<i64: 16, 16>}]} {
    %0 = tpu.iota {dimensions = array<i32: 0>} : vector<16x16xi32>
    %c16_i32 = arith.constant 16 : i32
    %1 = arith.muli %arg0, %c16_i32 : i32
    %2 = vector.broadcast %1 : i32 to vector<16x16xi32>
    %3 = arith.addi %0, %2 : vector<16x16xi32>
    %4 = tpu.iota {dimensions = array<i32: 1>} : vector<16x16xi32>
    %5 = arith.cmpi eq, %3, %4 : vector<16x16xi32>
    %c0 = arith.constant 0 : index
    %c0_0 = arith.constant 0 : index
    %6 = vector.load %arg1[%c0, %c0_0] : memref<16x16xf32, #tpu.memory_space<vmem>>, vector<16x16xf32>
    %cst = arith.constant 5.000000e-01 : f32
    %7 = vector.broadcast %cst : f32 to vector<16x16xf32>
    %8 = arith.mulf %7, %6 : vector<16x16xf32>
    %9 = math.tanh %8 : vector<16x16xf32>
    %cst_1 = arith.constant 5.000000e-01 : f32
    %10 = vector.broadcast %cst_1 : f32 to vector<16x16xf32>
    %11 = arith.mulf %10, %9 : vector<16x16xf32>
    %cst_2 = arith.constant 5.000000e-01 : f32
    %12 = vector.broadcast %cst_2 : f32 to vector<16x16xf32>
    %13 = arith.addf %11, %12 : vector<16x16xf32>
    %cst_3 = arith.constant 1.000000e+00 : f32
    %14 = vector.broadcast %cst_3 : f32 to vector<16x16xf32>
    %15 = arith.select %5, %14, %13 : vector<16x16xi1>, vector<16x16xf32>
    %c0_4 = arith.constant 0 : index
    %c0_5 = arith.constant 0 : index
    %16 = vector.load %arg2[%c0_4, %c0_5] : memref<16x16xf32, #tpu.memory_space<vmem>>, vector<16x16xf32>
    tpu.vector_store %arg2[%c0_4, %c0_5], %15 {strides = array<i32>} : memref<16x16xf32, #tpu.memory_space<vmem>>, vector<16x16xf32>,
    %c0_6 = arith.constant 0 : index
    %c0_7 = arith.constant 0 : index
    %17 = vector.load %arg2[%c0_6, %c0_7] : memref<16x16xf32, #tpu.memory_space<vmem>>, vector<16x16xf32>
    %cst_8 = arith.constant dense<0.000000e+00> : vector<16xf32>
    %18 = vector.multi_reduction <add>, %17, %cst_8 [1] : vector<16x16xf32> to vector<16xf32>
    %19 = vector.shape_cast %18 : vector<16xf32> to vector<16x1xf32>
    %c0_9 = arith.constant 0 : index
    %c0_10 = arith.constant 0 : index
    %20 = vector.load %arg2[%c0_9, %c0_10] : memref<16x16xf32, #tpu.memory_space<vmem>>, vector<16x16xf32>
    %21 = tpu.reciprocal %19 : vector<16x1xf32> -> vector<16x1xf32>
    %22 = vector.broadcast %21 : vector<16x1xf32> to vector<16x16xf32>
    %23 = arith.mulf %20, %22 : vector<16x16xf32>
    %c0_11 = arith.constant 0 : index
    %c0_12 = arith.constant 0 : index
    %24 = vector.load %arg2[%c0_11, %c0_12] : memref<16x16xf32, #tpu.memory_space<vmem>>, vector<16x16xf32>
    tpu.vector_store %arg2[%c0_11, %c0_12], %23 {strides = array<i32>} : memref<16x16xf32, #tpu.memory_space<vmem>>, vector<16x16xf32>,
    return
  }
  func.func @transform_0(%arg0: i32) -> (i32, i32) {
    %c0_i32 = arith.constant 0 : i32
    %c0_i32_0 = arith.constant 0 : i32
    return %arg0, %c0_i32 : i32, i32
  }
  func.func @transform_1(%arg0: i32) -> (i32, i32) {
    %c0_i32 = arith.constant 0 : i32
    %c0_i32_0 = arith.constant 0 : i32
    return %arg0, %c0_i32 : i32, i32
  }
}

</mosaic_0001>

<llo_original>
// kernel: tpu_custom_call.1
$region0: #{tpu_custom_call.1}
  #allocation0 [shape = 'u32[]', space=smem, size = 0x4, offset = 0x4, fixed_abs, tag = 'smem constant byte address 0x4 - core index']
  #allocation1 [shape = 'u32[72,128]{1,0:T(1,128)}', space=vmem, size = 0x9000, scoped, tag = 'internal scratch']
  %s0 = inlined_call_operand.hbm [shape: f32[16,16], index: 0, kind: input, shape index: {}]
  %s1 = inlined_call_operand.hbm [shape: f32[16,16], index: 1, kind: output, shape index: {}]
  %s2 = sld [smem:[#allocation0]]
  $region18: #{tpu_custom_call.1} parent=0
    _
  %s4 = ssub.s32 1, %s2
  %s5 = scalar_select 0, %s4, %s2
  $region1: #{tpu_custom_call.1} parent=0
    #allocation2 [shape = 'u8[8192]{0}', space=vmem, size = 0x2000, scoped, tag = 'input window, operand 0, single buffered']
    #allocation3 [shape = 's32[1]{0}', space=sflag, size = 0x4, scoped, tag = 'scoped memory for tpu_custom_call.1']
    #allocation4 [shape = 's32[1]{0}', space=sflag, size = 0x4, scoped, tag = 'scoped memory for tpu_custom_call.1']
    #allocation5 [shape = 'u8[8192]{0}', space=vmem, size = 0x2000, scoped, tag = 'output window, operand 0, single buffered']
    %6 = vsyncpa [#allocation3], 0
    %7 = vsyncpa [#allocation4], 0
    // Predicated region
    $region2: #{tpu_custom_call.1} parent=1 // pred_check
      _
    $region3: #{tpu_custom_call.1} parent=1 // pred_check_branch
      %9 = sbr.rel (0) target = $region5
    $region4: #{tpu_custom_call.1} parent=1 // pred_region
      %11 = vsyncadd [#allocation3], 0
      %s12 = sshll.u32 %s0, 4
      %s13 = int_to_ptr.hbm [resolvable:$true] %s12
      %s14 = sshll.u32 [#allocation2], 4
      %s15 = int_to_ptr.vmem [resolvable:$true] %s14
      %20 = dma.hbm_to_vmem [thread:$0]  %s13, 256, %s15, [#allocation3], 128, 128, 8
    $region5: #{tpu_custom_call.1} parent=1 // pred_fallthru
      _
    // Predicated region
    $region6: #{tpu_custom_call.1} parent=1 // pred_check
      _
    $region7: #{tpu_custom_call.1} parent=1 // pred_check_branch
      %22 = sbr.rel (0) target = $region9
    $region8: #{tpu_custom_call.1} parent=1 // pred_region
      %24 = dma.done [#allocation3], 256
    $region9: #{tpu_custom_call.1} parent=1 // pred_fallthru
      _
    %v25 = vlaneseq
    %v26 = vshrl.u32 %v25, 7
    %v27 = vadd.s32 %v26, 8
    %s28 = smul.u32 0, 16
    %v29 = vstv %s28
    %v30 = vadd.s32 %v26, %v29
    %v31 = vadd.s32 %v27, %v29
    %v32 = vlaneseq
    %v33 = vand.u32 %v32, 127
    %vm34 = vcmp.eq.s32.totalorder %v30, %v33
    %vm35 = vcmp.eq.s32.totalorder %v31, %v33
    %v36 = vld [vmem:[#allocation2] sm:$0xff]
    %v37 = vld [vmem:[#allocation2 + $0x8] sm:$0xff]
    %v38 = vmul.f32 %v36, 0.5
    %v39 = vmul.f32 %v37, 0.5
    %v40 = vtanh.pop %v38
    %v41 = vtanh.pop %v39
    %v42 = vmul.f32 %v40, 0.5
    %v43 = vmul.f32 %v41, 0.5
    %v44 = vadd.f32 %v42, 0.5
    %v45 = vadd.f32 %v43, 0.5
    %v46 = vsel %vm34, 1.0, %v44
    %v47 = vsel %vm35, 1.0, %v45
    %vm48 = vcmask 130048
    %49 = vst.msk [vmem:[#allocation5] sm:$0xff] %vm48, %v46
    %50 = vst.msk [vmem:[#allocation5 + $0x8] sm:$0xff] %vm48, %v47
    %v51 = vld [vmem:[#allocation5] sm:$0xff]
    %v52 = vld [vmem:[#allocation5 + $0x8] sm:$0xff]
    %v53 = vsel %vm48, %v51, 0.0
    %54 = vadd.xlane.f32.xlu0 %v53
    %v55 = vpop.xlane.xlu0 %54
    %v56 = vsel %vm48, %v52, 0.0
    %57 = vadd.xlane.f32.xlu0 %v56
    %v58 = vpop.xlane.xlu0 %57
    %v59 = vrcp.pop %v55
    %v60 = vmul.f32 %v55, %v59
    %v61 = vsub.f32 1.0, %v60
    %v62 = vmul.f32 %v59, %v61
    %v63 = vadd.f32 %v59, %v62
    %vm64 = vweird.f32 %v55
    %vm65 = vweird.f32 %v59
    %vm66 = vmor %vm64, %vm65
    %v67 = vsel %vm66, %v59, %v63
    %v68 = vand.u32 2147483647, %v55
    %vm69 = vcmp.eq.f32.partialorder %v68, 8.507059e+37
    %v70 = vand.u32 %v55, 2147483648
    %v71 = vor.u32 1.1754944e-38, %v70
    %v72 = vsel %vm69, %v71, %v67
    %v73 = vrcp.pop %v58
    %v74 = vmul.f32 %v58, %v73
    %v75 = vsub.f32 1.0, %v74
    %v76 = vmul.f32 %v73, %v75
    %v77 = vadd.f32 %v73, %v76
    %vm78 = vweird.f32 %v58
    %vm79 = vweird.f32 %v73
    %vm80 = vmor %vm78, %vm79
    %v81 = vsel %vm80, %v73, %v77
    %v82 = vand.u32 2147483647, %v58
    %vm83 = vcmp.eq.f32.partialorder %v82, 8.507059e+37
    %v84 = vand.u32 %v58, 2147483648
    %v85 = vor.u32 1.1754944e-38, %v84
    %v86 = vsel %vm83, %v85, %v81
    %v87 = vmul.f32 %v51, %v72
    %v88 = vmul.f32 %v52, %v86
    %89 = vst.msk [vmem:[#allocation5] sm:$0xff] %vm48, %v87
    %90 = vst.msk [vmem:[#allocation5 + $0x8] sm:$0xff] %vm48, %v88
    // Predicated region
    $region10: #{tpu_custom_call.1} parent=1 // pred_check
      _
    $region11: #{tpu_custom_call.1} parent=1 // pred_check_branch
      %92 = sbr.rel (0) target = $region13
    $region12: #{tpu_custom_call.1} parent=1 // pred_region
      %94 = vsyncadd [#allocation4], 0
      %s95 = sshll.u32 [#allocation5], 4
      %s96 = int_to_ptr.vmem [resolvable:$true] %s95
      %s97 = sshll.u32 %s1, 4
      %s98 = int_to_ptr.hbm [resolvable:$true] %s97
      %103 = dma.vmem_to_hbm [thread:$0]  %s96, 256, %s98, [#allocation4], 128, 128, 8
    $region13: #{tpu_custom_call.1} parent=1 // pred_fallthru
      _
    // Predicated region
    $region14: #{tpu_custom_call.1} parent=1 // pred_check
      _
    $region15: #{tpu_custom_call.1} parent=1 // pred_check_branch
      %105 = sbr.rel (0) target = $region17
    $region16: #{tpu_custom_call.1} parent=1 // pred_region
      %107 = dma.done [#allocation4], 256
    $region17: #{tpu_custom_call.1} parent=1 // pred_fallthru
      _
    %108 = vsyncpa [#allocation3], 1
    %109 = vsyncpa [#allocation4], 1

</llo_original>
